<compile_context>
chip_gen: v7x
topology: tpu7x:2x2x1
jax: 0.10.0
libtpu: 0.0.40
codegen_flags: <defaults>
</compile_context>

<pallas_src>
import jax
import jax.numpy as jnp
from jax.experimental import pallas as pl
from jax.experimental.pallas import tpu as pltpu


# ----------------------------------------------------------------------------
# Shared tile body: feat = relu(BN(conv1x1([fsp; fcp]))) for one spatial tile.
# ----------------------------------------------------------------------------
def _feat_tile(xsp_ref, xcp_ref, w1a_ref, w1b_ref, scale_ref, shift_ref):
    # xsp_ref: (1, C1, T) f32   xcp_ref: (1, C2, T) f32
    # w1a_ref: (Cout, C1) bf16  w1b_ref: (Cout, C2) bf16
    # scale_ref / shift_ref: (Cout, 1) f32 (folded eval-mode BatchNorm)
    xsp = xsp_ref[0].astype(jnp.bfloat16)            # in-kernel cast (VPU, free)
    xcp = xcp_ref[0].astype(jnp.bfloat16)
    feat = jnp.dot(w1a_ref[...], xsp, preferred_element_type=jnp.float32)
    feat = feat + jnp.dot(w1b_ref[...], xcp, preferred_element_type=jnp.float32)
    feat = feat * scale_ref[...] + shift_ref[...]
    return jnp.maximum(feat, 0.0)                    # (Cout, T) f32


# ----------------------------------------------------------------------------
# Pass 1: per-tile channel sums of feat (feeds the global average pool).
# ----------------------------------------------------------------------------
def ffm_sums_kernel(xsp_ref, xcp_ref, w1a_ref, w1b_ref, scale_ref, shift_ref,
                    psum_ref):
    feat = _feat_tile(xsp_ref, xcp_ref, w1a_ref, w1b_ref, scale_ref, shift_ref)
    psum_ref[0] = jnp.sum(feat, axis=-1, keepdims=True)   # (Cout, 1)


# ----------------------------------------------------------------------------
# Pass 2: out = feat * (atten + 1); feat is recomputed (no HBM intermediate).
# ----------------------------------------------------------------------------
def ffm_out_kernel(xsp_ref, xcp_ref, w1a_ref, w1b_ref, scale_ref, shift_ref,
                   gate_ref, out_ref):
    feat = _feat_tile(xsp_ref, xcp_ref, w1a_ref, w1b_ref, scale_ref, shift_ref)
    out_ref[0] = (feat * gate_ref[0]).astype(out_ref.dtype)   # gate = atten + 1


def _pick_tile_hw(hw_pad, bytes_per_col, max_tile=8192, vmem_budget=16 << 20):
    """Largest multiple of 128 dividing hw_pad, capped by a VMEM footprint budget."""
    cap = min(max_tile, hw_pad,
              max(128, (vmem_budget // max(bytes_per_col, 1)) // 128 * 128))
    best, t = 128, 128
    while t <= cap:
        if hw_pad % t == 0:
            best = t
        t += 128
    return best


def feature_fusion_module(fsp, fcp, params, tile_hw=None):
    """fsp, fcp: NCHW float32 tensors. Returns the NCHW output of the FFM."""
    N, C1, H, W = fsp.shape
    N2, C2, H2, W2 = fcp.shape
    assert (N, H, W) == (N2, H2, W2)
    HW = H * W

    w1a = params["w1a_t"]        # (Cout, C1)
    w1b = params["w1b_t"]        # (Cout, C2)
    scale = params["bn_scale"]   # (Cout, 1)
    shift = params["bn_shift"]   # (Cout, 1)
    w2 = params["w2_t"]          # (Cmid, Cout)
    w3 = params["w3_t"]          # (Cout, Cmid)
    Cout = w1a.shape[0]

    # Channel-major (N, C, H*W): pure reshape, no transpose / concat / convert.
    xsp = fsp.reshape(N, C1, HW)
    xcp = fcp.reshape(N, C2, HW)

    # Pad the spatial axis to a multiple of 128 (lane-aligned tiles on every gen).
    hw_pad = ((HW + 127) // 128) * 128
    n_pad = hw_pad - HW
    if n_pad:
        xsp = jnp.pad(xsp, ((0, 0), (0, 0), (0, n_pad)))
        xcp = jnp.pad(xcp, ((0, 0), (0, 0), (0, n_pad)))

    # VMEM-aware tile: f32 in/out double-buffered + bf16/f32 temps, per column.
    bytes_per_col = 12 * (C1 + C2 + Cout)
    if tile_hw is None:
        tile_hw = _pick_tile_hw(hw_pad, bytes_per_col)
    assert hw_pad % tile_hw == 0 and tile_hw % 128 == 0, (hw_pad, tile_hw)
    nt = hw_pad // tile_hw
    vmem_limit = int(min(max(32 << 20, bytes_per_col * tile_hw + (4 << 20)),
                         48 << 20))

    # 1x1-conv weights are tiny: one-time bf16 cast in the wrapper is fine.
    w1a_b = w1a.astype(jnp.bfloat16)
    w1b_b = w1b.astype(jnp.bfloat16)

    def const_spec(shape):
        return pl.BlockSpec(shape, lambda b, t: (0,) * len(shape))

    common_in_specs = [
        pl.BlockSpec((1, C1, tile_hw), lambda b, t: (b, 0, t)),
        pl.BlockSpec((1, C2, tile_hw), lambda b, t: (b, 0, t)),
        const_spec((Cout, C1)),
        const_spec((Cout, C2)),
        const_spec((Cout, 1)),
        const_spec((Cout, 1)),
    ]
    cparams = pltpu.CompilerParams(
        dimension_semantics=("parallel", "parallel"),   # no in-kernel reduction axis
        vmem_limit_bytes=vmem_limit,
    )

    # ---- Pass 1: per-tile channel sums (tiny output, fully parallel grid) ----
    psum = pl.pallas_call(
        ffm_sums_kernel,
        out_shape=jax.ShapeDtypeStruct((N * nt, Cout, 1), jnp.float32),
        grid_spec=pltpu.PrefetchScalarGridSpec(
            num_scalar_prefetch=0,
            grid=(N, nt),
            in_specs=common_in_specs,
            out_specs=pl.BlockSpec((1, Cout, 1), lambda b, t: (b * nt + t, 0, 0)),
        ),
        compiler_params=cparams,
    )(xsp, xcp, w1a_b, w1b_b, scale, shift)

    # ---- Tiny squeeze-excite branch in plain JAX (negligible work) ----------
    chsum = psum.reshape(N, nt, Cout).sum(axis=1)                    # (N, Cout)
    if n_pad:
        # A zero-padded pixel contributes exactly relu(shift) per channel.
        chsum = chsum - float(n_pad) * jnp.maximum(shift.reshape(1, Cout), 0.0)
    pooled = chsum / float(HW)                                       # global avg pool
    a = jnp.maximum(pooled @ w2.T, 0.0)                              # (N, Cmid)
    a = a @ w3.T                                                     # (N, Cout)
    gate = (jax.nn.sigmoid(a) + 1.0).reshape(N, Cout, 1).astype(jnp.float32)

    # ---- Pass 2: recompute feat and apply the gate, write NCHW output -------
    out = pl.pallas_call(
        ffm_out_kernel,
        out_shape=jax.ShapeDtypeStruct((N, Cout, hw_pad), jnp.float32),
        grid_spec=pltpu.PrefetchScalarGridSpec(
            num_scalar_prefetch=0,
            grid=(N, nt),
            in_specs=common_in_specs
            + [pl.BlockSpec((1, Cout, 1), lambda b, t: (b, 0, 0))],
            out_specs=pl.BlockSpec((1, Cout, tile_hw), lambda b, t: (b, 0, t)),
        ),
        compiler_params=cparams,
    )(xsp, xcp, w1a_b, w1b_b, scale, shift, gate)

    if n_pad:
        out = out[:, :, :HW]
    return out.reshape(N, Cout, H, W)


def make_params(key, c_sp, c_cp, out_chan, eps=1e-5):
    cmid = out_chan // 4
    in_chan = c_sp + c_cp
    k1, k2, k3, k4, k5, k6, k7 = jax.random.split(key, 7)
    # PyTorch Conv2d 1x1 weights are (out, in, 1, 1); stored squeezed (out, in).
    w1_t = jax.random.normal(k1, (out_chan, in_chan), jnp.float32) * 0.1
    w2_t = jax.random.normal(k2, (cmid, out_chan), jnp.float32) * 0.1
    w3_t = jax.random.normal(k3, (out_chan, cmid), jnp.float32) * 0.1
    # BatchNorm affine + running stats (eval-mode fold into scale/shift).
    gamma = 1.0 + 0.1 * jax.random.normal(k4, (out_chan,), jnp.float32)
    beta = 0.1 * jax.random.normal(k5, (out_chan,), jnp.float32)
    running_mean = 0.1 * jax.random.normal(k6, (out_chan,), jnp.float32)
    running_var = jnp.abs(1.0 + 0.1 * jax.random.normal(k7, (out_chan,), jnp.float32))
    scale = gamma / jnp.sqrt(running_var + eps)
    shift = beta - running_mean * scale
    return {
        "w1a_t": w1_t[:, :c_sp],                  # (Cout, C1)
        "w1b_t": w1_t[:, c_sp:],                  # (Cout, C2)
        "w2_t": w2_t,                             # (Cmid, Cout)
        "w3_t": w3_t,                             # (Cout, Cmid)
        "bn_scale": scale.reshape(out_chan, 1),   # (Cout, 1)
        "bn_shift": shift.reshape(out_chan, 1),   # (Cout, 1)
    }


def reference_ffm(fsp, fcp, params, matmul_dtype=jnp.float32):
    """Pure-JAX reference mirroring the PyTorch forward (eval-mode BN)."""
    x = jnp.concatenate([fsp, fcp], axis=1)                               # (N,Cin,H,W)
    w1_t = jnp.concatenate([params["w1a_t"], params["w1b_t"]], axis=1)    # (Cout,Cin)
    feat = jnp.einsum("oc,nchw->nohw",
                      w1_t.astype(matmul_dtype), x.astype(matmul_dtype),
                      preferred_element_type=jnp.float32)
    feat = feat * params["bn_scale"].reshape(1, -1, 1, 1) \
        + params["bn_shift"].reshape(1, -1, 1, 1)
    feat = jnp.maximum(feat, 0.0)
    pooled = jnp.mean(feat, axis=(2, 3))                                  # (N, Cout)
    a = jnp.maximum(pooled @ params["w2_t"].T, 0.0)                       # (N, Cmid)
    a = a @ params["w3_t"].T                                              # (N, Cout)
    atten = jax.nn.sigmoid(a)[:, :, None, None]
    return feat * atten + feat                                            # NCHW


def _check(out, fsp, fcp, params):
    ref_bf16 = jax.block_until_ready(
        reference_ffm(fsp, fcp, params, matmul_dtype=jnp.bfloat16))
    err_bf16 = float(jnp.max(jnp.abs(out - ref_bf16)))
    assert jnp.allclose(out, ref_bf16, atol=2e-3, rtol=2e-3), err_bf16
    ref_f32 = jax.block_until_ready(reference_ffm(fsp, fcp, params))
    err_f32 = float(jnp.max(jnp.abs(out - ref_f32)))
    assert jnp.allclose(out, ref_f32, atol=5e-2, rtol=5e-2), err_f32


if __name__ == "__main__":
    key = jax.random.PRNGKey(0)
    kf, kc, kp, kf2, kc2 = jax.random.split(key, 5)

    # Case 1: aligned spatial size, multiple spatial tiles, multiple images.
    N, C_sp, C_cp, H, W = 2, 4, 4, 16, 16      # HW = 256 -> two 128-wide tiles
    out_chan = 8                                # out_chan // 4 == 2
    fsp = jax.random.normal(kf, (N, C_sp, H, W), jnp.float32)
    fcp = jax.random.normal(kc, (N, C_cp, H, W), jnp.float32)
    params = make_params(kp, C_sp, C_cp, out_chan)
    out = feature_fusion_module(fsp, fcp, params, tile_hw=128)
    out = jax.block_until_ready(out)
    assert out.shape == (N, out_chan, H, W), out.shape
    _check(out, fsp, fcp, params)

    # Case 2: ragged spatial size (HW=100 -> padded to 128, pool corrected),
    # auto tile pick, single image.
    H2, W2 = 10, 10
    fsp2 = jax.random.normal(kf2, (1, C_sp, H2, W2), jnp.float32)
    fcp2 = jax.random.normal(kc2, (1, C_cp, H2, W2), jnp.float32)
    out2 = jax.block_until_ready(feature_fusion_module(fsp2, fcp2, params))
    assert out2.shape == (1, out_chan, H2, W2), out2.shape
    _check(out2, fsp2, fcp2, params)

    print("KERNEL_OK")
</pallas_src>

<mosaic_0001>
module attributes {stable_mosaic.version = 11 : i64} {
  func.func @ffm_sums_kernel(%arg0: i32, %arg1: i32, %arg2: memref<1x4x128xf32, #tpu.memory_space<vmem>>, %arg3: memref<1x4x128xf32, #tpu.memory_space<vmem>>, %arg4: memref<8x4xbf16, #tpu.memory_space<vmem>>, %arg5: memref<8x4xbf16, #tpu.memory_space<vmem>>, %arg6: memref<8x1xf32, #tpu.memory_space<vmem>>, %arg7: memref<8x1xf32, #tpu.memory_space<vmem>>, %arg8: memref<1x8x1xf32, #tpu.memory_space<vmem>>) attributes {dimension_semantics = [#tpu.dimension_semantics<parallel>, #tpu.dimension_semantics<parallel>], iteration_bounds = array<i64: 2, 2>, scalar_prefetch = 0 : i64, scratch_operands = 0 : i64, tpu.core_type = #tpu.core_type<tc>, window_params = [{transform_indices = @transform_0, window_bounds = array<i64: 1, 4, 128>}, {transform_indices = @transform_1, window_bounds = array<i64: 1, 4, 128>}, {pipeline_mode = #tpu.pipeline_mode<synchronous>, transform_indices = @transform_2, window_bounds = array<i64: 8, 4>}, {pipeline_mode = #tpu.pipeline_mode<synchronous>, transform_indices = @transform_3, window_bounds = array<i64: 8, 4>}, {pipeline_mode = #tpu.pipeline_mode<synchronous>, transform_indices = @transform_4, window_bounds = array<i64: 8, 1>}, {pipeline_mode = #tpu.pipeline_mode<synchronous>, transform_indices = @transform_5, window_bounds = array<i64: 8, 1>}, {transform_indices = @transform_6, window_bounds = array<i64: 1, 8, 1>}]} {
    %c0 = arith.constant 0 : index
    %c0_0 = arith.constant 0 : index
    %c0_1 = arith.constant 0 : index
    %0 = vector.load %arg2[%c0, %c0_0, %c0_1] : memref<1x4x128xf32, #tpu.memory_space<vmem>>, vector<1x4x128xf32>
    %1 = vector.shape_cast %0 : vector<1x4x128xf32> to vector<4x128xf32>
    %2 = arith.truncf %1 : vector<4x128xf32> to vector<4x128xbf16>
    %c0_2 = arith.constant 0 : index
    %c0_3 = arith.constant 0 : index
    %c0_4 = arith.constant 0 : index
    %3 = vector.load %arg3[%c0_2, %c0_3, %c0_4] : memref<1x4x128xf32, #tpu.memory_space<vmem>>, vector<1x4x128xf32>
    %4 = vector.shape_cast %3 : vector<1x4x128xf32> to vector<4x128xf32>
    %5 = arith.truncf %4 : vector<4x128xf32> to vector<4x128xbf16>
    %c0_5 = arith.constant 0 : index
    %c0_6 = arith.constant 0 : index
    %6 = vector.load %arg4[%c0_5, %c0_6] : memref<8x4xbf16, #tpu.memory_space<vmem>>, vector<8x4xbf16>
    %cst = arith.constant dense<0.000000e+00> : vector<8x128xf32>
    %7 = tpu.matmul %6, %2, %cst {dimension_numbers = #tpu.dot_dimension_numbers<[1], [0], [0], [1], [0, 0, 1, 1], [], []>} : vector<8x4xbf16>, vector<4x128xbf16>, vector<8x128xf32> -> vector<8x128xf32>
    %c0_7 = arith.constant 0 : index
    %c0_8 = arith.constant 0 : index
    %8 = vector.load %arg5[%c0_7, %c0_8] : memref<8x4xbf16, #tpu.memory_space<vmem>>, vector<8x4xbf16>
    %cst_9 = arith.constant dense<0.000000e+00> : vector<8x128xf32>
    %9 = tpu.matmul %8, %5, %cst_9 {dimension_numbers = #tpu.dot_dimension_numbers<[1], [0], [0], [1], [0, 0, 1, 1], [], []>} : vector<8x4xbf16>, vector<4x128xbf16>, vector<8x128xf32> -> vector<8x128xf32>
    %10 = arith.addf %7, %9 : vector<8x128xf32>
    %c0_10 = arith.constant 0 : index
    %c0_11 = arith.constant 0 : index
    %11 = vector.load %arg6[%c0_10, %c0_11] : memref<8x1xf32, #tpu.memory_space<vmem>>, vector<8x1xf32>
    %12 = vector.broadcast %11 : vector<8x1xf32> to vector<8x128xf32>
    %13 = arith.mulf %10, %12 : vector<8x128xf32>
    %c0_12 = arith.constant 0 : index
    %c0_13 = arith.constant 0 : index
    %14 = vector.load %arg7[%c0_12, %c0_13] : memref<8x1xf32, #tpu.memory_space<vmem>>, vector<8x1xf32>
    %15 = vector.broadcast %14 : vector<8x1xf32> to vector<8x128xf32>
    %16 = arith.addf %13, %15 : vector<8x128xf32>
    %cst_14 = arith.constant 0.000000e+00 : f32
    %17 = vector.broadcast %cst_14 : f32 to vector<8x128xf32>
    %18 = arith.maximumf %16, %17 : vector<8x128xf32>
    %cst_15 = arith.constant dense<0.000000e+00> : vector<8xf32>
    %19 = vector.multi_reduction <add>, %18, %cst_15 [1] : vector<8x128xf32> to vector<8xf32>
    %20 = vector.shape_cast %19 : vector<8xf32> to vector<8x1xf32>
    %c0_16 = arith.constant 0 : index
    %c0_17 = arith.constant 0 : index
    %c0_18 = arith.constant 0 : index
    %21 = vector.load %arg8[%c0_16, %c0_17, %c0_18] : memref<1x8x1xf32, #tpu.memory_space<vmem>>, vector<1x8x1xf32>
    %22 = vector.shape_cast %21 : vector<1x8x1xf32> to vector<8x1xf32>
    %23 = vector.shape_cast %20 : vector<8x1xf32> to vector<1x8x1xf32>
    tpu.vector_store %arg8[%c0_16, %c0_17, %c0_18], %23 {strides = array<i32>} : memref<1x8x1xf32, #tpu.memory_space<vmem>>, vector<1x8x1xf32>,
    return
  }
  func.func @transform_0(%arg0: i32, %arg1: i32) -> (i32, i32, i32) {
    %c0_i32 = arith.constant 0 : i32
    %c0_i32_0 = arith.constant 0 : i32
    return %arg0, %c0_i32, %arg1 : i32, i32, i32
  }
  func.func @transform_1(%arg0: i32, %arg1: i32) -> (i32, i32, i32) {
    %c0_i32 = arith.constant 0 : i32
    %c0_i32_0 = arith.constant 0 : i32
    return %arg0, %c0_i32, %arg1 : i32, i32, i32
  }
  func.func @transform_2(%arg0: i32, %arg1: i32) -> (i32, i32) {
    %c0_i32 = arith.constant 0 : i32
    %c0_i32_0 = arith.constant 0 : i32
    %c0_i32_1 = arith.constant 0 : i32
    return %c0_i32, %c0_i32_0 : i32, i32
  }
  func.func @transform_3(%arg0: i32, %arg1: i32) -> (i32, i32) {
    %c0_i32 = arith.constant 0 : i32
    %c0_i32_0 = arith.constant 0 : i32
    %c0_i32_1 = arith.constant 0 : i32
    return %c0_i32, %c0_i32_0 : i32, i32
  }
  func.func @transform_4(%arg0: i32, %arg1: i32) -> (i32, i32) {
    %c0_i32 = arith.constant 0 : i32
    %c0_i32_0 = arith.constant 0 : i32
    %c0_i32_1 = arith.constant 0 : i32
    return %c0_i32, %c0_i32_0 : i32, i32
  }
  func.func @transform_5(%arg0: i32, %arg1: i32) -> (i32, i32) {
    %c0_i32 = arith.constant 0 : i32
    %c0_i32_0 = arith.constant 0 : i32
    %c0_i32_1 = arith.constant 0 : i32
    return %c0_i32, %c0_i32_0 : i32, i32
  }
  func.func @transform_6(%arg0: i32, %arg1: i32) -> (i32, i32, i32) {
    %c2_i32 = arith.constant 2 : i32
    %0 = arith.muli %arg0, %c2_i32 : i32
    %1 = arith.addi %0, %arg1 : i32
    %c0_i32 = arith.constant 0 : i32
    %c0_i32_0 = arith.constant 0 : i32
    %c0_i32_1 = arith.constant 0 : i32
    return %1, %c0_i32, %c0_i32_0 : i32, i32, i32
  }
}

</mosaic_0001>

<llo_original>
// kernel: tpu_custom_call.1
$region0: #{tpu_custom_call.1}
  #allocation0 [shape = 'u32[]', space=smem, size = 0x4, offset = 0x4, fixed_abs, tag = 'smem constant byte address 0x4 - core index']
  #allocation1 [shape = 'u32[144,128]{1,0:T(1,128)}', space=vmem, size = 0x12000, scoped, tag = 'internal scratch']
  %s0 = inlined_call_operand.vmem [shape: f32[2,4,256], index: 0, kind: input, shape index: {}]
  %s1 = inlined_call_operand.vmem [shape: f32[2,4,256], index: 1, kind: input, shape index: {}]
  %s2 = inlined_call_operand.vmem [shape: bf16[8,4], index: 2, kind: input, shape index: {}]
  %s3 = inlined_call_operand.vmem [shape: bf16[8,4], index: 3, kind: input, shape index: {}]
  %s4 = inlined_call_operand.vmem [shape: f32[8,1], index: 4, kind: input, shape index: {}]
  %s5 = inlined_call_operand.vmem [shape: f32[8,1], index: 5, kind: input, shape index: {}]
  %s6 = inlined_call_operand.vmem [shape: f32[4,8,1], index: 6, kind: output, shape index: {}]
  %s7 = sld [smem:[#allocation0]]
  $region57: #{tpu_custom_call.1} parent=0
    _
  %s9 = ssub.s32 1, %s7
  %s10 = scalar_select 0, %s9, %s7
  loop: start=0, step=1, limit=6
  $region2: #{tpu_custom_call.1} parent=0 // loop_pre_header
    _
  $region3: #{tpu_custom_call.1} parent=0 // loop_header
    %s12 = sphi 0, %s16
    %p13 = scmp.ge.s32.totalorder %s12, 6
    %s19 = sphi 0, %s31
    %s20 = sphi 0, %s27
    %s21 = sphi 0, %s19
    %s22 = sphi 0, %s20
    %s23 = sphi 0, %s21
    %s24 = sphi 0, %s22
    %s36 = sphi 0, %s38
    %s39 = sphi 0, %s36
    %s40 = sphi 0, %s39
    %s56 = sphi 0, %s40
    %s64 = sphi 0, %s66
    %s67 = sphi 0, %s64
    %s68 = sphi 0, %s67
    %s84 = sphi 0, %s68
    %s88 = sphi 0, %s88
    %s90 = sphi 0, %s88
    %s91 = sphi 0, %s90
    %s105 = sphi 0, %s91
    %s109 = sphi 0, %s109
    %s111 = sphi 0, %s109
    %s112 = sphi 0, %s111
    %s126 = sphi 0, %s112
    %s130 = sphi 0, %s130
    %s132 = sphi 0, %s130
    %s133 = sphi 0, %s132
    %s147 = sphi 0, %s133
    %s151 = sphi 0, %s151
    %s153 = sphi 0, %s151
    %s154 = sphi 0, %s153
    %s168 = sphi 0, %s154
    %s178 = sphi 0, %s180
    %s181 = sphi 0, %s178
    %s182 = sphi 0, %s181
    %s198 = sphi 0, %s182
  $region4: #{tpu_custom_call.1} parent=0 // loop_header_branch
    %15 = sbr.rel (%p13) target = $region8
  $region5: #{tpu_custom_call.1} parent=0 // loop_body
    %s17 = ssub.s32 %s12, 1
    %s18 = ssub.s32 %s12, 2
    %s25 = sadd.s32 1, %s20
    %p26 = scmp.ge.s32.totalorder %s25, 2
    %s27 = scalar_select %p26, 0, %s25
    %s28 = sadd.s32 1, %s19
    %s29 = scalar_select %p26, %s28, %s19
    %p30 = scmp.ge.s32.totalorder %s29, 2
    %s31 = scalar_select %p30, 0, %s29
    %s32 = ssub.s32 %s19, %s31
    %s33 = ssub.s32 %s20, %s27
    %s34 = sor.u32 %s32, %s33
    %p35 = scmp.eq.s32.totalorder %s34, 0
    %s37 = sadd.s32 %s36, 1
    %s38 = scalar_select %p35, %s36, %s37
    %p41 = pneg %p35
    %p42 = scmp.eq.s32.totalorder %s12, 3
    %p43 = por %p41, %p42
    %p44 = scmp.ne.s32.totalorder %s36, %s39
    %p45 = scmp.eq.s32.totalorder %s12, 0
    %p46 = por %p44, %p45
    %p47 = scmp.ne.s32.totalorder %s36, %s39
    %p48 = scmp.eq.s32.totalorder %s17, 3
    %p49 = por %p47, %p48
    %p50 = scmp.ne.s32.totalorder %s39, %s40
    %p51 = scmp.eq.s32.totalorder %s17, 0
    %p52 = por %p50, %p51
    %p53 = scmp.ne.s32.totalorder %s39, %s40
    %p54 = scmp.eq.s32.totalorder %s18, 3
    %p55 = por %p53, %p54
    %p57 = scmp.ne.s32.totalorder %s40, %s56
    %p58 = scmp.eq.s32.totalorder %s18, 0
    %p59 = por %p57, %p58
    %s60 = ssub.s32 %s19, %s31
    %s61 = ssub.s32 %s20, %s27
    %s62 = sor.u32 %s60, %s61
    %p63 = scmp.eq.s32.totalorder %s62, 0
    %s65 = sadd.s32 %s64, 1
    %s66 = scalar_select %p63, %s64, %s65
    %p69 = pneg %p63
    %p70 = scmp.eq.s32.totalorder %s12, 3
    %p71 = por %p69, %p70
    %p72 = scmp.ne.s32.totalorder %s64, %s67
    %p73 = scmp.eq.s32.totalorder %s12, 0
    %p74 = por %p72, %p73
    %p75 = scmp.ne.s32.totalorder %s64, %s67
    %p76 = scmp.eq.s32.totalorder %s17, 3
    %p77 = por %p75, %p76
    %p78 = scmp.ne.s32.totalorder %s67, %s68
    %p79 = scmp.eq.s32.totalorder %s17, 0
    %p80 = por %p78, %p79
    %p81 = scmp.ne.s32.totalorder %s67, %s68
    %p82 = scmp.eq.s32.totalorder %s18, 3
    %p83 = por %p81, %p82
    %p85 = scmp.ne.s32.totalorder %s68, %s84
    %p86 = scmp.eq.s32.totalorder %s18, 0
    %p87 = por %p85, %p86
    %s89 = sadd.s32 %s88, 1
    %p92 = scmp.eq.s32.totalorder %s12, 3
    %p93 = scmp.ne.s32.totalorder %s88, %s90
    %p94 = scmp.eq.s32.totalorder %s12, 0
    %p95 = por %p93, %p94
    %p96 = scmp.ne.s32.totalorder %s88, %s90
    %p97 = scmp.eq.s32.totalorder %s17, 3
    %p98 = por %p96, %p97
    %p99 = scmp.ne.s32.totalorder %s90, %s91
    %p100 = scmp.eq.s32.totalorder %s17, 0
    %p101 = por %p99, %p100
    %p102 = scmp.ne.s32.totalorder %s90, %s91
    %p103 = scmp.eq.s32.totalorder %s18, 3
    %p104 = por %p102, %p103
    %p106 = scmp.ne.s32.totalorder %s91, %s105
    %p107 = scmp.eq.s32.totalorder %s18, 0
    %p108 = por %p106, %p107
    %s110 = sadd.s32 %s109, 1
    %p113 = scmp.eq.s32.totalorder %s12, 3
    %p114 = scmp.ne.s32.totalorder %s109, %s111
    %p115 = scmp.eq.s32.totalorder %s12, 0
    %p116 = por %p114, %p115
    %p117 = scmp.ne.s32.totalorder %s109, %s111
    %p118 = scmp.eq.s32.totalorder %s17, 3
    %p119 = por %p117, %p118
    %p120 = scmp.ne.s32.totalorder %s111, %s112
    %p121 = scmp.eq.s32.totalorder %s17, 0
    %p122 = por %p120, %p121
    %p123 = scmp.ne.s32.totalorder %s111, %s112
    %p124 = scmp.eq.s32.totalorder %s18, 3
    %p125 = por %p123, %p124
    %p127 = scmp.ne.s32.totalorder %s112, %s126
    %p128 = scmp.eq.s32.totalorder %s18, 0
    %p129 = por %p127, %p128
    %s131 = sadd.s32 %s130, 1
    %p134 = scmp.eq.s32.totalorder %s12, 3
    %p135 = scmp.ne.s32.totalorder %s130, %s132
    %p136 = scmp.eq.s32.totalorder %s12, 0
    %p137 = por %p135, %p136
    %p138 = scmp.ne.s32.totalorder %s130, %s132
    %p139 = scmp.eq.s32.totalorder %s17, 3
    %p140 = por %p138, %p139
    %p141 = scmp.ne.s32.totalorder %s132, %s133
    %p142 = scmp.eq.s32.totalorder %s17, 0
    %p143 = por %p141, %p142
    %p144 = scmp.ne.s32.totalorder %s132, %s133
    %p145 = scmp.eq.s32.totalorder %s18, 3
    %p146 = por %p144, %p145
    %p148 = scmp.ne.s32.totalorder %s133, %s147
    %p149 = scmp.eq.s32.totalorder %s18, 0
    %p150 = por %p148, %p149
    %s152 = sadd.s32 %s151, 1
    %p155 = scmp.eq.s32.totalorder %s12, 3
    %p156 = scmp.ne.s32.totalorder %s151, %s153
    %p157 = scmp.eq.s32.totalorder %s12, 0
    %p158 = por %p156, %p157
    %p159 = scmp.ne.s32.totalorder %s151, %s153
    %p160 = scmp.eq.s32.totalorder %s17, 3
    %p161 = por %p159, %p160
    %p162 = scmp.ne.s32.totalorder %s153, %s154
    %p163 = scmp.eq.s32.totalorder %s17, 0
    %p164 = por %p162, %p163
    %p165 = scmp.ne.s32.totalorder %s153, %s154
    %p166 = scmp.eq.s32.totalorder %s18, 3
    %p167 = por %p165, %p166
    %p169 = scmp.ne.s32.totalorder %s154, %s168
    %p170 = scmp.eq.s32.totalorder %s18, 0
    %p171 = por %p169, %p170
    %s172 = smul.u32 %s19, 2
    %s173 = sadd.s32 %s172, %s20
    %s174 = smul.u32 %s31, 2
    %s175 = sadd.s32 %s174, %s27
    %s176 = ssub.s32 %s173, %s175
    %p177 = scmp.eq.s32.totalorder %s176, 0
    %s179 = sadd.s32 %s178, 1
    %s180 = scalar_select %p177, %s178, %s179
    %p183 = pneg %p177
    %p184 = scmp.eq.s32.totalorder %s12, 3
    %p185 = por %p183, %p184
    %p186 = scmp.ne.s32.totalorder %s178, %s181
    %p187 = scmp.eq.s32.totalorder %s12, 0
    %p188 = por %p186, %p187
    %p189 = scmp.ne.s32.totalorder %s178, %s181
    %p190 = scmp.eq.s32.totalorder %s17, 3
    %p191 = por %p189, %p190
    %p192 = scmp.ne.s32.totalorder %s181, %s182
    %p193 = scmp.eq.s32.totalorder %s17, 0
    %p194 = por %p192, %p193
    %p195 = scmp.ne.s32.totalorder %s181, %s182
    %p196 = scmp.eq.s32.totalorder %s18, 3
    %p197 = por %p195, %p196
    %p199 = scmp.ne.s32.totalorder %s182, %s198
    %p200 = scmp.eq.s32.totalorder %s18, 0
    %p201 = por %p199, %p200
    %p202 = scmp.le.s32.totalorder 1, %s12
    %p203 = scmp.lt.s32.totalorder %s12, 5
    %p204 = pnand %p202, %p203
    %p205 = pneg %p204
    // Predicated region
    $region9: #{tpu_custom_call.1} parent=5 // pred_check
      _
    $region10: #{tpu_custom_call.1} parent=5 // pred_check_branch
      %207 = sbr.rel (%p204) target = $region12
    $region11: #{tpu_custom_call.1} parent=5 // pred_region
      %s208 = ssub.s32 %s12, 1
      // Predicated region
      $region13: #{tpu_custom_call.1} parent=11 // pred_check
        %p209 = pneg %p101
      $region14: #{tpu_custom_call.1} parent=11 // pred_check_branch
        %211 = sbr.rel (%p209) target = $region16
      $region15: #{tpu_custom_call.1} parent=11 // pred_region
        _
      $region16: #{tpu_custom_call.1} parent=11 // pred_fallthru
        _
      // Predicated region
      $region17: #{tpu_custom_call.1} parent=11 // pred_check
        %p212 = pneg %p122
      $region18: #{tpu_custom_call.1} parent=11 // pred_check_branch
        %214 = sbr.rel (%p212) target = $region20
      $region19: #{tpu_custom_call.1} parent=11 // pred_region
        _
      $region20: #{tpu_custom_call.1} parent=11 // pred_fallthru
        _
      // Predicated region
      $region21: #{tpu_custom_call.1} parent=11 // pred_check
        %p215 = pneg %p143
      $region22: #{tpu_custom_call.1} parent=11 // pred_check_branch
        %217 = sbr.rel (%p215) target = $region24
      $region23: #{tpu_custom_call.1} parent=11 // pred_region
        _
      $region24: #{tpu_custom_call.1} parent=11 // pred_fallthru
        _
      // Predicated region
      $region25: #{tpu_custom_call.1} parent=11 // pred_check
        %p218 = pneg %p164
      $region26: #{tpu_custom_call.1} parent=11 // pred_check_branch
        %220 = sbr.rel (%p218) target = $region28
      $region27: #{tpu_custom_call.1} parent=11 // pred_region
        _
      $region28: #{tpu_custom_call.1} parent=11 // pred_fallthru
        _
    $region12: #{tpu_custom_call.1} parent=5 // pred_fallthru
      _
    %p221 = scmp.lt.s32.totalorder %s12, 4
    // Predicated region
    $region29: #{tpu_custom_call.1} parent=5 // pred_check
      %p222 = pneg %p221
    $region30: #{tpu_custom_call.1} parent=5 // pred_check_branch
      %224 = sbr.rel (%p222) target = $region32
    $region31: #{tpu_custom_call.1} parent=5 // pred_region
      // Predicated region
      $region33: #{tpu_custom_call.1} parent=31 // pred_check
        %p225 = pneg %p46
      $region34: #{tpu_custom_call.1} parent=31 // pred_check_branch
        %227 = sbr.rel (%p225) target = $region36
      $region35: #{tpu_custom_call.1} parent=31 // pred_region
        %p228 = scmp.lt.s32.totalorder %s19, 1
        %s229 = scalar_select %p228, %s19, 1
        %p230 = scmp.lt.s32.totalorder %s20, 1
        %s231 = scalar_select %p230, %s20, 1
        %s232 = smul.addr %s229, 2
        %s233 = sadd.s32 %s231, %s232
        %s234 = smul.addr %s233, 4
        %s235 = scalar_lea.vmem %s0, %s234
      $region36: #{tpu_custom_call.1} parent=31 // pred_fallthru
        _
      // Predicated region
      $region37: #{tpu_custom_call.1} parent=31 // pred_check
        %p236 = pneg %p74
      $region38: #{tpu_custom_call.1} parent=31 // pred_check_branch
        %238 = sbr.rel (%p236) target = $region40
      $region39: #{tpu_custom_call.1} parent=31 // pred_region
        %p239 = scmp.lt.s32.totalorder %s19, 1
        %s240 = scalar_select %p239, %s19, 1
        %p241 = scmp.lt.s32.totalorder %s20, 1
        %s242 = scalar_select %p241, %s20, 1
        %s243 = smul.addr %s240, 2
        %s244 = sadd.s32 %s242, %s243
        %s245 = smul.addr %s244, 4
        %s246 = scalar_lea.vmem %s1, %s245
      $region40: #{tpu_custom_call.1} parent=31 // pred_fallthru
        _
    $region32: #{tpu_custom_call.1} parent=5 // pred_fallthru
      _
    %p247 = scmp.le.s32.totalorder 1, %s12
    %p248 = scmp.lt.s32.totalorder %s12, 5
    %p249 = pnand %p247, %p248
    %p250 = pneg %p249
    // Predicated region
    $region41: #{tpu_custom_call.1} parent=5 // pred_check
      _
    $region42: #{tpu_custom_call.1} parent=5 // pred_check_branch
      %252 = sbr.rel (%p249) target = $region44
    $region43: #{tpu_custom_call.1} parent=5 // pred_region
      %s253 = ssub.s32 %s12, 1
      %p254 = scmp.lt.s32.totalorder %s21, 1
      %s255 = scalar_select %p254, %s21, 1
      %p256 = scmp.lt.s32.totalorder %s22, 1
      %s257 = scalar_select %p256, %s22, 1
      %s258 = smul.addr %s255, 2
      %s259 = sadd.s32 %s257, %s258
      %s260 = smul.addr %s259, 4
      %s261 = scalar_lea.vmem %s0, %s260
      %p262 = pneg %p52
      %p263 = pneg %p49
      %p264 = scmp.lt.s32.totalorder %s21, 1
      %s265 = scalar_select %p264, %s21, 1
      %p266 = scmp.lt.s32.totalorder %s22, 1
      %s267 = scalar_select %p266, %s22, 1
      %s268 = smul.addr %s265, 2
      %s269 = sadd.s32 %s267, %s268
      %s270 = smul.addr %s269, 4
      %s271 = scalar_lea.vmem %s1, %s270
      %p272 = pneg %p80
      %p273 = pneg %p77
      %p274 = pneg %p101
      %p275 = pneg %p98
      %p276 = pneg %p122
      %p277 = pneg %p119
      %p278 = pneg %p143
      %p279 = pneg %p140
      %p280 = pneg %p164
      %p281 = pneg %p161
      %p282 = pneg %p194
      %p283 = pneg %p191
      %s284 = smul.u32 %s21, 2
      %s285 = sadd.s32 %s284, %s22
      %p286 = scmp.lt.s32.totalorder %s285, 3
      %s287 = scalar_select %p286, %s285, 3
      %s288 = smul.addr %s287, 8
      %s289 = scalar_lea.vmem %s6, %s288
      %p290 = scmp.lt.s32.totalorder %s21, 1
      %s291 = scalar_select %p290, %s21, 1
      %p292 = scmp.lt.s32.totalorder %s22, 1
      %s293 = scalar_select %p292, %s22, 1
      %s294 = smul.addr %s291, 2
      %s295 = sadd.s32 %s293, %s294
      %s296 = smul.addr %s295, 4
      %s297 = scalar_lea.vmem %s0, %s296
      %p298 = scmp.lt.s32.totalorder %s21, 1
      %s299 = scalar_select %p298, %s21, 1
      %p300 = scmp.lt.s32.totalorder %s22, 1
      %s301 = scalar_select %p300, %s22, 1
      %s302 = smul.addr %s299, 2
      %s303 = sadd.s32 %s301, %s302
      %s304 = smul.addr %s303, 4
      %s305 = scalar_lea.vmem %s1, %s304
      %s306 = smul.u32 %s21, 2
      %s307 = sadd.s32 %s306, %s22
      %p308 = scmp.lt.s32.totalorder %s307, 3
      %s309 = scalar_select %p308, %s307, 3
      %s310 = smul.addr %s309, 8
      %s311 = scalar_lea.vmem %s6, %s310
      %s312 = smul.u32 %s21, 2
      %s313 = sadd.s32 %s312, %s22
      %v315 = vld [vmem:[%s297] sm:$0xf]
      %v316 = vpack.c.bf16 %v315, %v315
      %v317 = vld [vmem:[%s305] sm:$0xf]
      %v318 = vpack.c.bf16 %v317, %v317
      %v319 = vld [vmem:[%s2] sm:$0xf]
      %v320 = vld [vmem:[%s3] sm:$0xf]
      %vm321 = vcmask 31744
      %v323 = vsel %vm321, %v320, 0
      %vm325 = vcmask 1041408
      %v327 = vsel %vm325, %v318, 0
      %329 = vmatprep.subr.bf16.mxu0 0
      %330 = vmatpush1.bf16.msra.mxu0 %v327
      %331 = vmatprep.subr.bf16.mxu0 0
      %332 = vmatpush1.bf16.msra.mxu0 0
      %333 = vmatprep.subr.bf16.mxu0 0
      %334 = vmatpush1.bf16.msra.mxu0 0
      %335 = vmatprep.subr.bf16.mxu0 0
      %336 = vmatpush1.bf16.msra.mxu0 0
      %337 = vmatprep.subr.bf16.mxu0 0
      %338 = vmatpush1.bf16.msra.mxu0 0
      %339 = vmatprep.subr.bf16.mxu0 0
      %340 = vmatpush1.bf16.msra.mxu0 0
      %341 = vmatprep.subr.bf16.mxu0 0
      %342 = vmatpush1.bf16.msra.mxu0 0
      %343 = vmatprep.subr.bf16.mxu0 0
      %344 = vmatpush1.bf16.msra.mxu0 0
      %345 = vmatprep.subr.bf16.mxu0 0
      %346 = vmatpush1.bf16.msra.mxu0 0
      %347 = vmatprep.subr.bf16.mxu0 0
      %348 = vmatpush1.bf16.msra.mxu0 0
      %349 = vmatprep.subr.bf16.mxu0 0
      %350 = vmatpush1.bf16.msra.mxu0 0
      %351 = vmatprep.subr.bf16.mxu0 0
      %352 = vmatpush1.bf16.msra.mxu0 0
      %353 = vmatprep.subr.bf16.mxu0 0
      %354 = vmatpush1.bf16.msra.mxu0 0
      %355 = vmatprep.subr.bf16.mxu0 0
      %356 = vmatpush1.bf16.msra.mxu0 0
      %357 = vmatprep.subr.bf16.mxu0 0
      %358 = vmatpush1.bf16.msra.mxu0 0
      %359 = vmatprep.subr.bf16.mxu0 0
      %360 = vmatpush1.bf16.msra.mxu0 0
      %361 = vmatprep.mubr.bf16.mxu0 0
      %362 = vmatmul.mubr.bf16.gmra.mrb[0].mxu0 %v323
      %v363 = vpop.f32.mrb[0].mxu0
      %v364 = vadd.f32 0.0, %v363
      %v365 = vpop.f32.mrb[0].mxu0
      %v366 = vpop.f32.mrb[0].mxu0
      %v367 = vpop.f32.mrb[0].mxu0
      %368 = vdwg.mxu0
      %v370 = vsel %vm321, %v319, 0
      %v373 = vsel %vm325, %v316, 0
      %375 = vmatprep.subr.bf16.mxu0 0
      %376 = vmatpush1.bf16.msra.mxu0 %v373
      %377 = vmatprep.subr.bf16.mxu0 0
      %378 = vmatpush1.bf16.msra.mxu0 0
      %379 = vmatprep.subr.bf16.mxu0 0
      %380 = vmatpush1.bf16.msra.mxu0 0
      %381 = vmatprep.subr.bf16.mxu0 0
      %382 = vmatpush1.bf16.msra.mxu0 0
      %383 = vmatprep.subr.bf16.mxu0 0
      %384 = vmatpush1.bf16.msra.mxu0 0
      %385 = vmatprep.subr.bf16.mxu0 0
      %386 = vmatpush1.bf16.msra.mxu0 0
      %387 = vmatprep.subr.bf16.mxu0 0
      %388 = vmatpush1.bf16.msra.mxu0 0
      %389 = vmatprep.subr.bf16.mxu0 0
      %390 = vmatpush1.bf16.msra.mxu0 0
      %391 = vmatprep.subr.bf16.mxu0 0
      %392 = vmatpush1.bf16.msra.mxu0 0
      %393 = vmatprep.subr.bf16.mxu0 0
      %394 = vmatpush1.bf16.msra.mxu0 0
      %395 = vmatprep.subr.bf16.mxu0 0
      %396 = vmatpush1.bf16.msra.mxu0 0
      %397 = vmatprep.subr.bf16.mxu0 0
      %398 = vmatpush1.bf16.msra.mxu0 0
      %399 = vmatprep.subr.bf16.mxu0 0
      %400 = vmatpush1.bf16.msra.mxu0 0
      %401 = vmatprep.subr.bf16.mxu0 0
      %402 = vmatpush1.bf16.msra.mxu0 0
      %403 = vmatprep.subr.bf16.mxu0 0
      %404 = vmatpush1.bf16.msra.mxu0 0
      %405 = vmatprep.subr.bf16.mxu0 0
      %406 = vmatpush1.bf16.msra.mxu0 0
      %407 = vmatprep.mubr.bf16.mxu0 0
      %408 = vmatmul.mubr.bf16.gmra.mrb[0].mxu0 %v370
      %v409 = vpop.f32.mrb[0].mxu0
      %v410 = vadd.f32 %v364, %v409
      %v411 = vpop.f32.mrb[0].mxu0
      %v412 = vpop.f32.mrb[0].mxu0
      %v413 = vpop.f32.mrb[0].mxu0
      %414 = vdwg.mxu0
      %v415 = vld [vmem:[%s4] sm:$0xff]
      %417 = vset.pattern.permute.xlu0 0
      %418 = vperm.xlu0 %417, %v415
      %v419 = vpop.permute.xlu0 %418
      %v421 = vmul.f32 %v410, %v419
      %v422 = vld [vmem:[%s5] sm:$0xff]
      %424 = vset.pattern.permute.xlu0 0
      %425 = vperm.xlu0 %424, %v422
      %v426 = vpop.permute.xlu0 %425
      %v428 = vadd.f32 %v421, %v426
      %v429 = vmax.f32 %v428, 0.0
      %430 = vadd.xlane.f32.xlu0 %v429
      %v431 = vpop.xlane.xlu0 %430
      %vm432 = vcmask 7168
      %433 = vst.msk [vmem:[%s311] sm:$0xff] %vm432, %v431
      %s434 = smul.u32 %s21, 2
      %s435 = sadd.s32 %s434, %s22
      %p436 = scmp.lt.s32.totalorder %s435, 3
      %s437 = scalar_select %p436, %s435, 3
      %s438 = smul.addr %s437, 8
      %s439 = scalar_lea.vmem %s6, %s438
      // Predicated region
      $region45: #{tpu_custom_call.1} parent=43 // pred_check
        %p440 = pneg %p191
      $region46: #{tpu_custom_call.1} parent=43 // pred_check_branch
        %442 = sbr.rel (%p440) target = $region48
      $region47: #{tpu_custom_call.1} parent=43 // pred_region
        %s443 = smul.u32 %s21, 2
        %s444 = sadd.s32 %s443, %s22
      $region48: #{tpu_custom_call.1} parent=43 // pred_fallthru
        _
    $region44: #{tpu_custom_call.1} parent=5 // pred_fallthru
      _
    %p445 = scmp.le.s32.totalorder 2, %s12
    // Predicated region
    $region49: #{tpu_custom_call.1} parent=5 // pred_check
      %p446 = pneg %p445
    $region50: #{tpu_custom_call.1} parent=5 // pred_check_branch
      %448 = sbr.rel (%p446) target = $region52
    $region51: #{tpu_custom_call.1} parent=5 // pred_region
      %s449 = ssub.s32 %s12, 2
      // Predicated region
      $region53: #{tpu_custom_call.1} parent=51 // pred_check
        %p450 = pneg %p197
      $region54: #{tpu_custom_call.1} parent=51 // pred_check_branch
        %452 = sbr.rel (%p450) target = $region56
      $region55: #{tpu_custom_call.1} parent=51 // pred_region
        %s453 = smul.u32 %s23, 2
        %s454 = sadd.s32 %s453, %s24
        %p455 = scmp.lt.s32.totalorder %s454, 3
        %s456 = scalar_select %p455, %s454, 3
        %s457 = smul.addr %s456, 8
        %s458 = scalar_lea.vmem %s6, %s457
      $region56: #{tpu_custom_call.1} parent=51 // pred_fallthru
        _
    $region52: #{tpu_custom_call.1} parent=5 // pred_fallthru
      _
  $region6: #{tpu_custom_call.1} parent=0 // loop_footer
    %s16 = sadd.s32 1, %s12
  $region7: #{tpu_custom_call.1} parent=0 // loop_footer_branch
    %11 = sbr.rel target = $region3
  $region8: #{tpu_custom_call.1} parent=0 // loop_exit
    _

</llo_original>
